<compile_context>
chip_gen: v7x
topology: tpu7x:2x2x1
jax: 0.10.0
libtpu: 0.0.40
codegen_flags: <defaults>
</compile_context>

<pallas_src>
import numpy as np
import jax
import jax.numpy as jnp
from jax.experimental import pallas as pl
from jax.experimental.pallas import tpu as pltpu


# ----------------------------------------------------------------------------
# Pallas kernel: complex channel mixing with modes on the lane axis.
#
#   a_ref : (2, B*Cin,    TM)  real/imag of x_ft at the retained modes
#   w_ref : (2, Cin*Cout, TM)  real/imag spectral weights (row = i*Cout + o)
#   o_ref : (2, B*Cout,   TM)  (row = b*Cout + o)
#   out[b, o, m] = sum_i a[b, i, m] * w[i, o, m]   (complex)
# ----------------------------------------------------------------------------
def _make_mode_mix_kernel(B, Cin, Cout):
    def kernel(a_ref, w_ref, o_ref):
        TM = a_ref.shape[-1]
        a_r = a_ref[0]            # (B*Cin, TM)
        a_i = a_ref[1]
        w_r = w_ref[0]            # (Cin*Cout, TM)
        w_i = w_ref[1]

        acc_r = jnp.zeros((B * Cout, TM), jnp.float32)
        acc_i = jnp.zeros((B * Cout, TM), jnp.float32)

        # Static unroll over the small input-channel axis.  Each iteration
        # updates the FULL (B*Cout, TM) accumulator so the FMAs run on full
        # (8,128) vregs; the operand expansions (sublane broadcast of one
        # activation row per batch, B-fold tile of the weight slab) are
        # load/XLU work that doesn't occupy the VALU slot.
        for i in range(Cin):
            wr_i = w_r[i * Cout:(i + 1) * Cout, :]          # (Cout, TM)
            wi_i = w_i[i * Cout:(i + 1) * Cout, :]
            wr_b = jnp.tile(wr_i, (B, 1))                   # (B*Cout, TM)
            wi_b = jnp.tile(wi_i, (B, 1))
            ar_b = jnp.concatenate(
                [jnp.broadcast_to(a_r[b * Cin + i:b * Cin + i + 1, :], (Cout, TM))
                 for b in range(B)], axis=0)                # (B*Cout, TM)
            ai_b = jnp.concatenate(
                [jnp.broadcast_to(a_i[b * Cin + i:b * Cin + i + 1, :], (Cout, TM))
                 for b in range(B)], axis=0)
            acc_r = acc_r + ar_b * wr_b - ai_b * wi_b
            acc_i = acc_i + ar_b * wi_b + ai_b * wr_b

        o_ref[0] = acc_r
        o_ref[1] = acc_i

    return kernel


def _select_tile(m_pad, B, Cin, Cout):
    """Largest multiple-of-128 lane tile that divides m_pad and fits the budget."""
    ceil8 = lambda n: -(-n // 8) * 8
    # f32 bytes * (re+im) * double-buffer * sublane-padded rows of all 3 blocks.
    per_lane = 4 * 2 * 2 * (ceil8(B * Cin) + ceil8(Cin * Cout) + ceil8(B * Cout))
    budget = 12 << 20              # well under default scoped VMEM on v5e/v6e/v7x
    cap = 1024                     # diminishing returns beyond this tile width
    if m_pad >= 256:
        cap = min(cap, m_pad // 2)  # >=2 grid steps so v7x can shard over 2 TCs
    start = max(128, (min(cap, m_pad) // 128) * 128)
    tm = 128
    for cand in range(start, 127, -128):
        if m_pad % cand == 0 and cand * per_lane <= budget:
            tm = cand
            break
    return tm


def _mode_mix(a, w, B, Cin, Cout):
    """a: (2, B*Cin, m_pad) f32;  w: (2, Cin*Cout, m_pad) f32 -> (2, B*Cout, m_pad)."""
    m_pad = a.shape[-1]
    tm = _select_tile(m_pad, B, Cin, Cout)
    kernel = _make_mode_mix_kernel(B, Cin, Cout)

    return pl.pallas_call(
        kernel,
        out_shape=jax.ShapeDtypeStruct((2, B * Cout, m_pad), jnp.float32),
        grid_spec=pltpu.PrefetchScalarGridSpec(
            num_scalar_prefetch=0,
            grid=(m_pad // tm,),
            in_specs=[
                pl.BlockSpec((2, B * Cin, tm), lambda m: (0, 0, m)),
                pl.BlockSpec((2, Cin * Cout, tm), lambda m: (0, 0, m)),
            ],
            out_specs=pl.BlockSpec((2, B * Cout, tm), lambda m: (0, 0, m)),
        ),
        compiler_params=pltpu.CompilerParams(
            dimension_semantics=("parallel",),   # modes independent -> v7x 2-TC
        ),
    )(a, w)


# ----------------------------------------------------------------------------
# SpectralConv2d forward (gridy=None path of the PyTorch module).
# ----------------------------------------------------------------------------
class SpectralConv2d:
    def __init__(self, in_channels, out_channels, modes1, modes2, key):
        self.in_channels = in_channels
        self.out_channels = out_channels
        self.modes1 = modes1
        self.modes2 = modes2
        scale = 1.0 / (in_channels * out_channels)
        k1, k2, k3, k4 = jax.random.split(key, 4)
        shape = (in_channels, out_channels, modes1, modes2)
        # torch.rand(..., dtype=torch.cfloat): real & imag uniform in [0, 1)
        self.w1 = (scale * jax.random.uniform(k1, shape, jnp.float32)) + 1j * (
            scale * jax.random.uniform(k2, shape, jnp.float32)
        )
        self.w2 = (scale * jax.random.uniform(k3, shape, jnp.float32)) + 1j * (
            scale * jax.random.uniform(k4, shape, jnp.float32)
        )
        self.w1 = self.w1.astype(jnp.complex64)
        self.w2 = self.w2.astype(jnp.complex64)

        # Precompute the kernel layout ONCE: modes of both corners flattened onto
        # the last (lane) axis and zero-padded to a multiple of 128, channels
        # folded onto the sublane axis (row = i*Cout + o), re/im stacked on a
        # leading size-2 axis.
        Mh = modes1 * modes2
        M = 2 * Mh
        m_pad = -(-M // 128) * 128
        w = jnp.concatenate(
            [self.w1.reshape(in_channels, out_channels, Mh),
             self.w2.reshape(in_channels, out_channels, Mh)],
            axis=-1,
        ).reshape(in_channels * out_channels, M)            # (Cin*Cout, 2*Mh)
        w_st = jnp.stack([jnp.real(w), jnp.imag(w)], axis=0).astype(jnp.float32)
        self._w = jnp.pad(w_st, ((0, 0), (0, 0), (0, m_pad - M)))
        self._m_pad = m_pad

    def __call__(self, x):
        # x: (B, Cin, H, W) float32
        B, Cin, H, W = x.shape
        m1, m2 = self.modes1, self.modes2
        Cout = self.out_channels
        Mh = m1 * m2
        M = 2 * Mh
        Wr = W // 2 + 1

        # TODO(synk): FFT has no Pallas primitive; rfftn/irfftn stay in jnp/XLA.
        x_ft = jnp.fft.rfftn(x, axes=(2, 3))  # (B, Cin, H, Wr) complex64

        # Both retained corners with the (m1, m2) mode axes flattened onto the
        # last (lane) axis; leading (B, Cin) folded onto sublanes.
        a1 = x_ft[:, :, :m1, :m2].reshape(B, Cin, Mh)
        a2 = x_ft[:, :, H - m1:, :m2].reshape(B, Cin, Mh)
        a = jnp.concatenate([a1, a2], axis=-1).reshape(B * Cin, M)
        a_st = jnp.stack([jnp.real(a), jnp.imag(a)], axis=0).astype(jnp.float32)
        a_st = jnp.pad(a_st, ((0, 0), (0, 0), (0, self._m_pad - M)))

        out = _mode_mix(a_st, self._w, B, Cin, Cout)        # (2, B*Cout, m_pad)
        out_c = jax.lax.complex(out[0], out[1])[:, :M].reshape(B, Cout, M)
        out1 = out_c[:, :, :Mh].reshape(B, Cout, m1, m2)
        out2 = out_c[:, :, Mh:].reshape(B, Cout, m1, m2)

        if H >= 2 * m1:
            # Assemble the spectrum by concat + pad: no full zeros buffer
            # rewritten by two scatters.
            mid = jnp.zeros((B, Cout, H - 2 * m1, m2), dtype=jnp.complex64)
            band = jnp.concatenate([out1, mid, out2], axis=2)      # (B,Cout,H,m2)
            out_ft = jnp.pad(band, ((0, 0), (0, 0), (0, 0), (0, Wr - m2)))
        else:
            # Overlapping corner bands: fall back to the scatter semantics of
            # the reference module (second write wins).
            out_ft = jnp.zeros((B, Cout, H, Wr), dtype=jnp.complex64)
            out_ft = out_ft.at[:, :, :m1, :m2].set(out1)
            out_ft = out_ft.at[:, :, H - m1:, :m2].set(out2)

        return jnp.fft.irfftn(out_ft, s=(H, W), axes=(2, 3))  # (B, Cout, H, W)


# ----------------------------------------------------------------------------
# Pure-JAX reference for verification.
# ----------------------------------------------------------------------------
def _reference(x, w1, w2, m1, m2, Cout):
    B, Cin, H, W = x.shape
    x_ft = jnp.fft.rfftn(x, axes=(2, 3))
    out_ft = jnp.zeros((B, Cout, H, W // 2 + 1), dtype=jnp.complex64)
    f1 = jnp.einsum("bixy,ioxy->boxy", x_ft[:, :, :m1, :m2], w1)
    f2 = jnp.einsum("bixy,ioxy->boxy", x_ft[:, :, -m1:, :m2], w2)
    out_ft = out_ft.at[:, :, :m1, :m2].set(f1)
    out_ft = out_ft.at[:, :, H - m1:, :m2].set(f2)
    return jnp.fft.irfftn(out_ft, s=(H, W), axes=(2, 3))


if __name__ == "__main__":
    key = jax.random.PRNGKey(0)
    k_x, k_w = jax.random.split(key)

    B, Cin, Cout, H, W = 2, 4, 4, 16, 16
    modes1, modes2 = 4, 4

    x = jax.random.normal(k_x, (B, Cin, H, W), dtype=jnp.float32)

    layer = SpectralConv2d(Cin, Cout, modes1, modes2, k_w)
    y = layer(x)
    y = jax.block_until_ready(y)

    y_ref = jax.block_until_ready(
        _reference(x, layer.w1, layer.w2, modes1, modes2, Cout)
    )

    assert y.shape == (B, Cout, H, W), y.shape
    np.testing.assert_allclose(np.asarray(y), np.asarray(y_ref), rtol=1e-4, atol=1e-5)
    print("KERNEL_OK")
</pallas_src>

<mosaic_0001>
module attributes {stable_mosaic.version = 11 : i64} {
  func.func @kernel(%arg0: i32, %arg1: memref<2x8x128xf32, #tpu.memory_space<vmem>>, %arg2: memref<2x16x128xf32, #tpu.memory_space<vmem>>, %arg3: memref<2x8x128xf32, #tpu.memory_space<vmem>>) attributes {dimension_semantics = [#tpu.dimension_semantics<parallel>], iteration_bounds = array<i64: 1>, scalar_prefetch = 0 : i64, scratch_operands = 0 : i64, tpu.core_type = #tpu.core_type<tc>, window_params = [{transform_indices = @transform_0, window_bounds = array<i64: 2, 8, 128>}, {transform_indices = @transform_1, window_bounds = array<i64: 2, 16, 128>}, {transform_indices = @transform_2, window_bounds = array<i64: 2, 8, 128>}]} {
    %c0 = arith.constant 0 : index
    %c0_0 = arith.constant 0 : index
    %c0_1 = arith.constant 0 : index
    %0 = vector.load %arg1[%c0, %c0_0, %c0_1] : memref<2x8x128xf32, #tpu.memory_space<vmem>>, vector<1x8x128xf32>
    %1 = vector.shape_cast %0 : vector<1x8x128xf32> to vector<8x128xf32>
    %c1 = arith.constant 1 : index
    %c0_2 = arith.constant 0 : index
    %c0_3 = arith.constant 0 : index
    %2 = vector.load %arg1[%c1, %c0_2, %c0_3] : memref<2x8x128xf32, #tpu.memory_space<vmem>>, vector<1x8x128xf32>
    %3 = vector.shape_cast %2 : vector<1x8x128xf32> to vector<8x128xf32>
    %c0_4 = arith.constant 0 : index
    %c0_5 = arith.constant 0 : index
    %c0_6 = arith.constant 0 : index
    %4 = vector.load %arg2[%c0_4, %c0_5, %c0_6] : memref<2x16x128xf32, #tpu.memory_space<vmem>>, vector<1x16x128xf32>
    %5 = vector.shape_cast %4 : vector<1x16x128xf32> to vector<16x128xf32>
    %c1_7 = arith.constant 1 : index
    %c0_8 = arith.constant 0 : index
    %c0_9 = arith.constant 0 : index
    %6 = vector.load %arg2[%c1_7, %c0_8, %c0_9] : memref<2x16x128xf32, #tpu.memory_space<vmem>>, vector<1x16x128xf32>
    %7 = vector.shape_cast %6 : vector<1x16x128xf32> to vector<16x128xf32>
    %cst = arith.constant 0.000000e+00 : f32
    %8 = vector.broadcast %cst : f32 to vector<8x128xf32>
    %cst_10 = arith.constant 0.000000e+00 : f32
    %9 = vector.broadcast %cst_10 : f32 to vector<8x128xf32>
    %10 = vector.extract_strided_slice %5 {offsets = [0, 0], sizes = [4, 128], strides = [1, 1]} : vector<16x128xf32> to vector<4x128xf32>
    %11 = vector.extract_strided_slice %7 {offsets = [0, 0], sizes = [4, 128], strides = [1, 1]} : vector<16x128xf32> to vector<4x128xf32>
    %12 = tpu.concatenate %10, %10 in 0 : vector<4x128xf32>, vector<4x128xf32> -> vector<8x128xf32>
    %13 = tpu.concatenate %11, %11 in 0 : vector<4x128xf32>, vector<4x128xf32> -> vector<8x128xf32>
    %14 = vector.extract_strided_slice %1 {offsets = [0, 0], sizes = [1, 128], strides = [1, 1]} : vector<8x128xf32> to vector<1x128xf32>
    %15 = vector.shape_cast %14 : vector<1x128xf32> to vector<1x128xf32>
    %16 = vector.broadcast %15 : vector<1x128xf32> to vector<4x128xf32>
    %17 = vector.extract_strided_slice %1 {offsets = [4, 0], sizes = [1, 128], strides = [1, 1]} : vector<8x128xf32> to vector<1x128xf32>
    %18 = vector.shape_cast %17 : vector<1x128xf32> to vector<1x128xf32>
    %19 = vector.broadcast %18 : vector<1x128xf32> to vector<4x128xf32>
    %20 = tpu.concatenate %16, %19 in 0 : vector<4x128xf32>, vector<4x128xf32> -> vector<8x128xf32>
    %21 = vector.extract_strided_slice %3 {offsets = [0, 0], sizes = [1, 128], strides = [1, 1]} : vector<8x128xf32> to vector<1x128xf32>
    %22 = vector.shape_cast %21 : vector<1x128xf32> to vector<1x128xf32>
    %23 = vector.broadcast %22 : vector<1x128xf32> to vector<4x128xf32>
    %24 = vector.extract_strided_slice %3 {offsets = [4, 0], sizes = [1, 128], strides = [1, 1]} : vector<8x128xf32> to vector<1x128xf32>
    %25 = vector.shape_cast %24 : vector<1x128xf32> to vector<1x128xf32>
    %26 = vector.broadcast %25 : vector<1x128xf32> to vector<4x128xf32>
    %27 = tpu.concatenate %23, %26 in 0 : vector<4x128xf32>, vector<4x128xf32> -> vector<8x128xf32>
    %28 = arith.mulf %20, %12 : vector<8x128xf32>
    %29 = arith.addf %8, %28 : vector<8x128xf32>
    %30 = arith.mulf %27, %13 : vector<8x128xf32>
    %31 = arith.subf %29, %30 : vector<8x128xf32>
    %32 = arith.mulf %20, %13 : vector<8x128xf32>
    %33 = arith.addf %9, %32 : vector<8x128xf32>
    %34 = arith.mulf %27, %12 : vector<8x128xf32>
    %35 = arith.addf %33, %34 : vector<8x128xf32>
    %36 = vector.extract_strided_slice %5 {offsets = [4, 0], sizes = [4, 128], strides = [1, 1]} : vector<16x128xf32> to vector<4x128xf32>
    %37 = vector.extract_strided_slice %7 {offsets = [4, 0], sizes = [4, 128], strides = [1, 1]} : vector<16x128xf32> to vector<4x128xf32>
    %38 = tpu.concatenate %36, %36 in 0 : vector<4x128xf32>, vector<4x128xf32> -> vector<8x128xf32>
    %39 = tpu.concatenate %37, %37 in 0 : vector<4x128xf32>, vector<4x128xf32> -> vector<8x128xf32>
    %40 = vector.extract_strided_slice %1 {offsets = [1, 0], sizes = [1, 128], strides = [1, 1]} : vector<8x128xf32> to vector<1x128xf32>
    %41 = vector.shape_cast %40 : vector<1x128xf32> to vector<1x128xf32>
    %42 = vector.broadcast %41 : vector<1x128xf32> to vector<4x128xf32>
    %43 = vector.extract_strided_slice %1 {offsets = [5, 0], sizes = [1, 128], strides = [1, 1]} : vector<8x128xf32> to vector<1x128xf32>
    %44 = vector.shape_cast %43 : vector<1x128xf32> to vector<1x128xf32>
    %45 = vector.broadcast %44 : vector<1x128xf32> to vector<4x128xf32>
    %46 = tpu.concatenate %42, %45 in 0 : vector<4x128xf32>, vector<4x128xf32> -> vector<8x128xf32>
    %47 = vector.extract_strided_slice %3 {offsets = [1, 0], sizes = [1, 128], strides = [1, 1]} : vector<8x128xf32> to vector<1x128xf32>
    %48 = vector.shape_cast %47 : vector<1x128xf32> to vector<1x128xf32>
    %49 = vector.broadcast %48 : vector<1x128xf32> to vector<4x128xf32>
    %50 = vector.extract_strided_slice %3 {offsets = [5, 0], sizes = [1, 128], strides = [1, 1]} : vector<8x128xf32> to vector<1x128xf32>
    %51 = vector.shape_cast %50 : vector<1x128xf32> to vector<1x128xf32>
    %52 = vector.broadcast %51 : vector<1x128xf32> to vector<4x128xf32>
    %53 = tpu.concatenate %49, %52 in 0 : vector<4x128xf32>, vector<4x128xf32> -> vector<8x128xf32>
    %54 = arith.mulf %46, %38 : vector<8x128xf32>
    %55 = arith.addf %31, %54 : vector<8x128xf32>
    %56 = arith.mulf %53, %39 : vector<8x128xf32>
    %57 = arith.subf %55, %56 : vector<8x128xf32>
    %58 = arith.mulf %46, %39 : vector<8x128xf32>
    %59 = arith.addf %35, %58 : vector<8x128xf32>
    %60 = arith.mulf %53, %38 : vector<8x128xf32>
    %61 = arith.addf %59, %60 : vector<8x128xf32>
    %62 = vector.extract_strided_slice %5 {offsets = [8, 0], sizes = [4, 128], strides = [1, 1]} : vector<16x128xf32> to vector<4x128xf32>
    %63 = vector.extract_strided_slice %7 {offsets = [8, 0], sizes = [4, 128], strides = [1, 1]} : vector<16x128xf32> to vector<4x128xf32>
    %64 = tpu.concatenate %62, %62 in 0 : vector<4x128xf32>, vector<4x128xf32> -> vector<8x128xf32>
    %65 = tpu.concatenate %63, %63 in 0 : vector<4x128xf32>, vector<4x128xf32> -> vector<8x128xf32>
    %66 = vector.extract_strided_slice %1 {offsets = [2, 0], sizes = [1, 128], strides = [1, 1]} : vector<8x128xf32> to vector<1x128xf32>
    %67 = vector.shape_cast %66 : vector<1x128xf32> to vector<1x128xf32>
    %68 = vector.broadcast %67 : vector<1x128xf32> to vector<4x128xf32>
    %69 = vector.extract_strided_slice %1 {offsets = [6, 0], sizes = [1, 128], strides = [1, 1]} : vector<8x128xf32> to vector<1x128xf32>
    %70 = vector.shape_cast %69 : vector<1x128xf32> to vector<1x128xf32>
    %71 = vector.broadcast %70 : vector<1x128xf32> to vector<4x128xf32>
    %72 = tpu.concatenate %68, %71 in 0 : vector<4x128xf32>, vector<4x128xf32> -> vector<8x128xf32>
    %73 = vector.extract_strided_slice %3 {offsets = [2, 0], sizes = [1, 128], strides = [1, 1]} : vector<8x128xf32> to vector<1x128xf32>
    %74 = vector.shape_cast %73 : vector<1x128xf32> to vector<1x128xf32>
    %75 = vector.broadcast %74 : vector<1x128xf32> to vector<4x128xf32>
    %76 = vector.extract_strided_slice %3 {offsets = [6, 0], sizes = [1, 128], strides = [1, 1]} : vector<8x128xf32> to vector<1x128xf32>
    %77 = vector.shape_cast %76 : vector<1x128xf32> to vector<1x128xf32>
    %78 = vector.broadcast %77 : vector<1x128xf32> to vector<4x128xf32>
    %79 = tpu.concatenate %75, %78 in 0 : vector<4x128xf32>, vector<4x128xf32> -> vector<8x128xf32>
    %80 = arith.mulf %72, %64 : vector<8x128xf32>
    %81 = arith.addf %57, %80 : vector<8x128xf32>
    %82 = arith.mulf %79, %65 : vector<8x128xf32>
    %83 = arith.subf %81, %82 : vector<8x128xf32>
    %84 = arith.mulf %72, %65 : vector<8x128xf32>
    %85 = arith.addf %61, %84 : vector<8x128xf32>
    %86 = arith.mulf %79, %64 : vector<8x128xf32>
    %87 = arith.addf %85, %86 : vector<8x128xf32>
    %88 = vector.extract_strided_slice %5 {offsets = [12, 0], sizes = [4, 128], strides = [1, 1]} : vector<16x128xf32> to vector<4x128xf32>
    %89 = vector.extract_strided_slice %7 {offsets = [12, 0], sizes = [4, 128], strides = [1, 1]} : vector<16x128xf32> to vector<4x128xf32>
    %90 = tpu.concatenate %88, %88 in 0 : vector<4x128xf32>, vector<4x128xf32> -> vector<8x128xf32>
    %91 = tpu.concatenate %89, %89 in 0 : vector<4x128xf32>, vector<4x128xf32> -> vector<8x128xf32>
    %92 = vector.extract_strided_slice %1 {offsets = [3, 0], sizes = [1, 128], strides = [1, 1]} : vector<8x128xf32> to vector<1x128xf32>
    %93 = vector.shape_cast %92 : vector<1x128xf32> to vector<1x128xf32>
    %94 = vector.broadcast %93 : vector<1x128xf32> to vector<4x128xf32>
    %95 = vector.extract_strided_slice %1 {offsets = [7, 0], sizes = [1, 128], strides = [1, 1]} : vector<8x128xf32> to vector<1x128xf32>
    %96 = vector.shape_cast %95 : vector<1x128xf32> to vector<1x128xf32>
    %97 = vector.broadcast %96 : vector<1x128xf32> to vector<4x128xf32>
    %98 = tpu.concatenate %94, %97 in 0 : vector<4x128xf32>, vector<4x128xf32> -> vector<8x128xf32>
    %99 = vector.extract_strided_slice %3 {offsets = [3, 0], sizes = [1, 128], strides = [1, 1]} : vector<8x128xf32> to vector<1x128xf32>
    %100 = vector.shape_cast %99 : vector<1x128xf32> to vector<1x128xf32>
    %101 = vector.broadcast %100 : vector<1x128xf32> to vector<4x128xf32>
    %102 = vector.extract_strided_slice %3 {offsets = [7, 0], sizes = [1, 128], strides = [1, 1]} : vector<8x128xf32> to vector<1x128xf32>
    %103 = vector.shape_cast %102 : vector<1x128xf32> to vector<1x128xf32>
    %104 = vector.broadcast %103 : vector<1x128xf32> to vector<4x128xf32>
    %105 = tpu.concatenate %101, %104 in 0 : vector<4x128xf32>, vector<4x128xf32> -> vector<8x128xf32>
    %106 = arith.mulf %98, %90 : vector<8x128xf32>
    %107 = arith.addf %83, %106 : vector<8x128xf32>
    %108 = arith.mulf %105, %91 : vector<8x128xf32>
    %109 = arith.subf %107, %108 : vector<8x128xf32>
    %110 = arith.mulf %98, %91 : vector<8x128xf32>
    %111 = arith.addf %87, %110 : vector<8x128xf32>
    %112 = arith.mulf %105, %90 : vector<8x128xf32>
    %113 = arith.addf %111, %112 : vector<8x128xf32>
    %c0_11 = arith.constant 0 : index
    %c0_12 = arith.constant 0 : index
    %c0_13 = arith.constant 0 : index
    %114 = vector.load %arg3[%c0_11, %c0_12, %c0_13] : memref<2x8x128xf32, #tpu.memory_space<vmem>>, vector<1x8x128xf32>
    %115 = vector.shape_cast %114 : vector<1x8x128xf32> to vector<8x128xf32>
    %116 = vector.shape_cast %109 : vector<8x128xf32> to vector<1x8x128xf32>
    tpu.vector_store %arg3[%c0_11, %c0_12, %c0_13], %116 {strides = array<i32>} : memref<2x8x128xf32, #tpu.memory_space<vmem>>, vector<1x8x128xf32>,
    %c1_14 = arith.constant 1 : index
    %c0_15 = arith.constant 0 : index
    %c0_16 = arith.constant 0 : index
    %117 = vector.load %arg3[%c1_14, %c0_15, %c0_16] : memref<2x8x128xf32, #tpu.memory_space<vmem>>, vector<1x8x128xf32>
    %118 = vector.shape_cast %117 : vector<1x8x128xf32> to vector<8x128xf32>
    %119 = vector.shape_cast %113 : vector<8x128xf32> to vector<1x8x128xf32>
    tpu.vector_store %arg3[%c1_14, %c0_15, %c0_16], %119 {strides = array<i32>} : memref<2x8x128xf32, #tpu.memory_space<vmem>>, vector<1x8x128xf32>,
    return
  }
  func.func @transform_0(%arg0: i32) -> (i32, i32, i32) {
    %c0_i32 = arith.constant 0 : i32
    %c0_i32_0 = arith.constant 0 : i32
    %c0_i32_1 = arith.constant 0 : i32
    return %c0_i32, %c0_i32_0, %arg0 : i32, i32, i32
  }
  func.func @transform_1(%arg0: i32) -> (i32, i32, i32) {
    %c0_i32 = arith.constant 0 : i32
    %c0_i32_0 = arith.constant 0 : i32
    %c0_i32_1 = arith.constant 0 : i32
    return %c0_i32, %c0_i32_0, %arg0 : i32, i32, i32
  }
  func.func @transform_2(%arg0: i32) -> (i32, i32, i32) {
    %c0_i32 = arith.constant 0 : i32
    %c0_i32_0 = arith.constant 0 : i32
    %c0_i32_1 = arith.constant 0 : i32
    return %c0_i32, %c0_i32_0, %arg0 : i32, i32, i32
  }
}

</mosaic_0001>

<llo_original>
// kernel: tpu_custom_call.1
$region0: #{tpu_custom_call.1}
  #allocation0 [shape = 'u32[]', space=smem, size = 0x4, offset = 0x4, fixed_abs, tag = 'smem constant byte address 0x4 - core index']
  #allocation1 [shape = 'u32[144,128]{1,0:T(1,128)}', space=vmem, size = 0x12000, scoped, tag = 'internal scratch']
  %s0 = inlined_call_operand.hbm [shape: f32[2,8,128], index: 0, kind: input, shape index: {}]
  %s1 = inlined_call_operand.hbm [shape: f32[2,16,128], index: 1, kind: input, shape index: {}]
  %s2 = inlined_call_operand.hbm [shape: f32[2,8,128], index: 2, kind: output, shape index: {}]
  %s3 = sld [smem:[#allocation0]]
  $region26: #{tpu_custom_call.1} parent=0
    _
  %s5 = ssub.s32 1, %s3
  %s6 = scalar_select 0, %s5, %s3
  $region1: #{tpu_custom_call.1} parent=0
    #allocation2 [shape = 'u8[8192]{0}', space=vmem, size = 0x2000, scoped, tag = 'input window, operand 0, single buffered']
    #allocation3 [shape = 's32[1]{0}', space=sflag, size = 0x4, scoped, tag = 'scoped memory for tpu_custom_call.1']
    #allocation4 [shape = 's32[1]{0}', space=sflag, size = 0x4, scoped, tag = 'scoped memory for tpu_custom_call.1']
    #allocation5 [shape = 'u8[16384]{0}', space=vmem, size = 0x4000, scoped, tag = 'input window, operand 1, single buffered']
    #allocation6 [shape = 's32[1]{0}', space=sflag, size = 0x4, scoped, tag = 'scoped memory for tpu_custom_call.1']
    #allocation7 [shape = 'u8[8192]{0}', space=vmem, size = 0x2000, scoped, tag = 'output window, operand 0, single buffered']
    %7 = vsyncpa [#allocation3], 0
    %8 = vsyncpa [#allocation6], 0
    %9 = vsyncpa [#allocation4], 0
    // Predicated region
    $region2: #{tpu_custom_call.1} parent=1 // pred_check
      _
    $region3: #{tpu_custom_call.1} parent=1 // pred_check_branch
      %11 = sbr.rel (0) target = $region5
    $region4: #{tpu_custom_call.1} parent=1 // pred_region
      %s13 = ssub.s32 256, 256
      %14 = vsyncadd [#allocation3], %s13
      %s15 = sshll.u32 [#allocation2], 4
      %s16 = int_to_ptr.vmem [resolvable:$true] %s15
      %21 = dma.hbm_to_vmem [thread:$0]  %s0, 256, %s16, [#allocation3], 128, 128, 8
    $region5: #{tpu_custom_call.1} parent=1 // pred_fallthru
      _
    // Predicated region
    $region6: #{tpu_custom_call.1} parent=1 // pred_check
      _
    $region7: #{tpu_custom_call.1} parent=1 // pred_check_branch
      %23 = sbr.rel (0) target = $region9
    $region8: #{tpu_custom_call.1} parent=1 // pred_region
      %s25 = ssub.s32 512, 512
      %26 = vsyncadd [#allocation6], %s25
      %s27 = sshll.u32 [#allocation5], 4
      %s28 = int_to_ptr.vmem [resolvable:$true] %s27
      %33 = dma.hbm_to_vmem [thread:$0]  %s1, 512, %s28, [#allocation6], 128, 128, 8
    $region9: #{tpu_custom_call.1} parent=1 // pred_fallthru
      _
    // Predicated region
    $region10: #{tpu_custom_call.1} parent=1 // pred_check
      _
    $region11: #{tpu_custom_call.1} parent=1 // pred_check_branch
      %35 = sbr.rel (0) target = $region13
    $region12: #{tpu_custom_call.1} parent=1 // pred_region
      %36 = dma.done [#allocation3], 256
    $region13: #{tpu_custom_call.1} parent=1 // pred_fallthru
      _
    // Predicated region
    $region14: #{tpu_custom_call.1} parent=1 // pred_check
      _
    $region15: #{tpu_custom_call.1} parent=1 // pred_check_branch
      %38 = sbr.rel (0) target = $region17
    $region16: #{tpu_custom_call.1} parent=1 // pred_region
      %39 = dma.done [#allocation6], 512
    $region17: #{tpu_custom_call.1} parent=1 // pred_fallthru
      _
    %v40 = vld [vmem:[#allocation2] sm:$0xff]
    %s41 = scalar_lea.vmem [#allocation2], 8
    %v42 = vld [vmem:[%s41] sm:$0xff]
    %v43 = vld [vmem:[#allocation5] sm:$0xff]
    %v44 = vld [vmem:[#allocation5 + $0x8] sm:$0xff]
    %s45 = scalar_lea.vmem [#allocation5], 16
    %v46 = vld [vmem:[%s45] sm:$0xff]
    %v47 = vld [vmem:[%s45 + $0x8] sm:$0xff]
    %v49 = vrot.slane %v43, 4
    %vm51 = vcmask 1043456
    %v52 = vsel %vm51, %v43, %v49
    %v54 = vrot.slane %v46, 4
    %v56 = vsel %vm51, %v46, %v54
    %v57 = vlaneseq
    %v58 = vshrl.u32 %v57, 7
    %v59 = vsub.s32 0, %v58
    %v60 = vrot.slane %v40, %v59
    %v61 = vlaneseq
    %v62 = vshrl.u32 %v61, 7
    %v63 = vsub.s32 4, %v62
    %v64 = vrot.slane %v40, %v63
    %v65 = vsel %vm51, %v60, %v64
    %v66 = vlaneseq
    %v67 = vshrl.u32 %v66, 7
    %v68 = vsub.s32 0, %v67
    %v69 = vrot.slane %v42, %v68
    %v70 = vlaneseq
    %v71 = vshrl.u32 %v70, 7
    %v72 = vsub.s32 4, %v71
    %v73 = vrot.slane %v42, %v72
    %v74 = vsel %vm51, %v69, %v73
    %v75 = vmul.f32 %v65, %v52
    %v76 = vadd.f32 %v75, 0.0
    %v77 = vmul.f32 %v74, %v56
    %v78 = vsub.f32 %v76, %v77
    %v79 = vmul.f32 %v65, %v56
    %v80 = vadd.f32 %v79, 0.0
    %v81 = vmul.f32 %v74, %v52
    %v82 = vadd.f32 %v80, %v81
    %v83 = vsel %vm51, %v49, %v43
    %v84 = vsel %vm51, %v54, %v46
    %v85 = vlaneseq
    %v86 = vshrl.u32 %v85, 7
    %v87 = vsub.s32 1, %v86
    %v88 = vrot.slane %v40, %v87
    %v89 = vlaneseq
    %v90 = vshrl.u32 %v89, 7
    %v91 = vsub.s32 5, %v90
    %v92 = vrot.slane %v40, %v91
    %v93 = vsel %vm51, %v88, %v92
    %v94 = vlaneseq
    %v95 = vshrl.u32 %v94, 7
    %v96 = vsub.s32 1, %v95
    %v97 = vrot.slane %v42, %v96
    %v98 = vlaneseq
    %v99 = vshrl.u32 %v98, 7
    %v100 = vsub.s32 5, %v99
    %v101 = vrot.slane %v42, %v100
    %v102 = vsel %vm51, %v97, %v101
    %v103 = vmul.f32 %v93, %v83
    %v104 = vadd.f32 %v78, %v103
    %v105 = vmul.f32 %v102, %v84
    %v106 = vsub.f32 %v104, %v105
    %v107 = vmul.f32 %v93, %v84
    %v108 = vadd.f32 %v82, %v107
    %v109 = vmul.f32 %v102, %v83
    %v110 = vadd.f32 %v108, %v109
    %v112 = vrot.slane %v44, 4
    %v114 = vsel %vm51, %v44, %v112
    %v116 = vrot.slane %v47, 4
    %v118 = vsel %vm51, %v47, %v116
    %v119 = vlaneseq
    %v120 = vshrl.u32 %v119, 7
    %v121 = vsub.s32 2, %v120
    %v122 = vrot.slane %v40, %v121
    %v123 = vlaneseq
    %v124 = vshrl.u32 %v123, 7
    %v125 = vsub.s32 6, %v124
    %v126 = vrot.slane %v40, %v125
    %v127 = vsel %vm51, %v122, %v126
    %v128 = vlaneseq
    %v129 = vshrl.u32 %v128, 7
    %v130 = vsub.s32 2, %v129
    %v131 = vrot.slane %v42, %v130
    %v132 = vlaneseq
    %v133 = vshrl.u32 %v132, 7
    %v134 = vsub.s32 6, %v133
    %v135 = vrot.slane %v42, %v134
    %v136 = vsel %vm51, %v131, %v135
    %v137 = vmul.f32 %v127, %v114
    %v138 = vadd.f32 %v106, %v137
    %v139 = vmul.f32 %v136, %v118
    %v140 = vsub.f32 %v138, %v139
    %v141 = vmul.f32 %v127, %v118
    %v142 = vadd.f32 %v110, %v141
    %v143 = vmul.f32 %v136, %v114
    %v144 = vadd.f32 %v142, %v143
    %v145 = vsel %vm51, %v112, %v44
    %v146 = vsel %vm51, %v116, %v47
    %v147 = vlaneseq
    %v148 = vshrl.u32 %v147, 7
    %v149 = vsub.s32 3, %v148
    %v150 = vrot.slane %v40, %v149
    %v151 = vlaneseq
    %v152 = vshrl.u32 %v151, 7
    %v153 = vsub.s32 7, %v152
    %v154 = vrot.slane %v40, %v153
    %v155 = vsel %vm51, %v150, %v154
    %v156 = vlaneseq
    %v157 = vshrl.u32 %v156, 7
    %v158 = vsub.s32 3, %v157
    %v159 = vrot.slane %v42, %v158
    %v160 = vlaneseq
    %v161 = vshrl.u32 %v160, 7
    %v162 = vsub.s32 7, %v161
    %v163 = vrot.slane %v42, %v162
    %v164 = vsel %vm51, %v159, %v163
    %v165 = vmul.f32 %v155, %v145
    %v166 = vadd.f32 %v140, %v165
    %v167 = vmul.f32 %v164, %v146
    %v168 = vsub.f32 %v166, %v167
    %v169 = vmul.f32 %v155, %v146
    %v170 = vadd.f32 %v144, %v169
    %v171 = vmul.f32 %v164, %v145
    %v172 = vadd.f32 %v170, %v171
    %173 = vst [vmem:[#allocation7] sm:$0xff] %v168
    %s174 = scalar_lea.vmem [#allocation7], 8
    %175 = vst [vmem:[%s174] sm:$0xff] %v172
    // Predicated region
    $region18: #{tpu_custom_call.1} parent=1 // pred_check
      _
    $region19: #{tpu_custom_call.1} parent=1 // pred_check_branch
      %177 = sbr.rel (0) target = $region21
    $region20: #{tpu_custom_call.1} parent=1 // pred_region
      %s179 = ssub.s32 256, 256
      %180 = vsyncadd [#allocation4], %s179
      %s181 = sshll.u32 [#allocation7], 4
      %s182 = int_to_ptr.vmem [resolvable:$true] %s181
      %187 = dma.vmem_to_hbm [thread:$0]  %s182, 256, %s2, [#allocation4], 128, 128, 8
    $region21: #{tpu_custom_call.1} parent=1 // pred_fallthru
      _
    // Predicated region
    $region22: #{tpu_custom_call.1} parent=1 // pred_check
      _
    $region23: #{tpu_custom_call.1} parent=1 // pred_check_branch
      %189 = sbr.rel (0) target = $region25
    $region24: #{tpu_custom_call.1} parent=1 // pred_region
      %190 = dma.done [#allocation4], 256
    $region25: #{tpu_custom_call.1} parent=1 // pred_fallthru
      _
    %191 = vsyncpa [#allocation3], 1
    %192 = vsyncpa [#allocation6], 1
    %193 = vsyncpa [#allocation4], 1

</llo_original>
